<compile_context>
chip_gen: v5e
topology: v5e:2x2
jax: 0.10.0
libtpu: 0.0.40
codegen_flags: <defaults>
</compile_context>

<pallas_src>
import jax
import jax.numpy as jnp
import numpy as np
from jax.experimental import pallas as pl
from jax.experimental.pallas import tpu as pltpu


def make_positional_encoding(seq_len: int, embed_dim: int) -> jnp.ndarray:
    """Deterministic sinusoidal table, identical semantics to the PyTorch loop."""
    i = np.arange(seq_len, dtype=np.float64)[:, None]            # (S, 1)
    j = np.arange(embed_dim, dtype=np.float64)[None, :]          # (1, D)
    even_exp = j / embed_dim
    odd_exp = (j - 1.0) / embed_dim
    pe = np.where(
        (np.arange(embed_dim) % 2 == 0)[None, :],
        np.sin(i / np.power(10000.0, even_exp)),
        np.cos(i / np.power(10000.0, odd_exp)),
    )
    return jnp.asarray(pe, dtype=jnp.float32)                    # (S, D)


def _add_pe_kernel(x_ref, pe_ref, o_ref):
    # x_ref/o_ref: (TB, TL) row/lane tile of the flattened (B, S*D) tensor.
    # pe_ref:      (1, TL) matching lane tile of the flattened PE table; the
    #              sublane broadcast to TB rows is a cheap 2-D broadcast.
    o_ref[...] = x_ref[...] + pe_ref[...]


def _pick_tiles(num_rows: int, num_lanes: int, bytes_per_elem: int = 4):
    """Pick (row_tile, lane_tile) obeying the (8,128) rule, ~4 MiB per buffer."""
    # Lane tile: full dim if small, else a large multiple of 128 (remainder
    # blocks are padded by Pallas).
    MAX_LANE_TILE = 2048
    if num_lanes <= MAX_LANE_TILE:
        lane_tile = num_lanes                       # == full dim -> always legal
    else:
        lane_tile = MAX_LANE_TILE                   # multiple of 128

    # Row tile: cap so one x tile is <= ~4 MiB; must be full dim or mult. of 8.
    max_rows = max(8, (4 * 1024 * 1024) // (lane_tile * bytes_per_elem))
    if num_rows <= max_rows:
        row_tile = num_rows                         # == full dim -> always legal
    else:
        row_tile = (max_rows // 8) * 8              # multiple of 8
    return row_tile, lane_tile


def positional_encoding_forward(x: jnp.ndarray, pe: jnp.ndarray) -> jnp.ndarray:
    """x: (B, S, D) float32; pe: (S, D) float32. Returns x + pe (broadcast over B)."""
    B, S, D = x.shape
    assert pe.shape == (S, D)
    SD = S * D

    # Lane-dense layout: last dim becomes S*D (multiple of 128 for typical D).
    x2 = x.reshape(B, SD)
    pe2 = pe.reshape(1, SD)

    tb, tl = _pick_tiles(B, SD, jnp.dtype(x.dtype).itemsize)

    # Grid: lane tiles outer, row tiles inner -> PE block index is constant
    # along the inner axis, so its VMEM buffer stays resident (fetched ~once).
    grid = (pl.cdiv(SD, tl), pl.cdiv(B, tb))

    out2 = pl.pallas_call(
        _add_pe_kernel,
        out_shape=jax.ShapeDtypeStruct((B, SD), x.dtype),
        grid_spec=pltpu.PrefetchScalarGridSpec(
            num_scalar_prefetch=0,
            grid=grid,
            in_specs=[
                pl.BlockSpec((tb, tl), lambda j, i: (i, j)),   # x rows/lanes
                pl.BlockSpec((1, tl), lambda j, i: (0, j)),    # pe, row-resident
            ],
            out_specs=pl.BlockSpec((tb, tl), lambda j, i: (i, j)),
        ),
        compiler_params=pltpu.CompilerParams(
            dimension_semantics=("parallel", "parallel"),
            vmem_limit_bytes=48 * 1024 * 1024,
        ),
    )(x2, pe2)

    return out2.reshape(B, S, D)


if __name__ == "__main__":
    # Small shapes consistent with the module: batch=2, seq_len=8, embed_dim=32
    B, S, D = 2, 8, 32
    key = jax.random.PRNGKey(0)
    x = jax.random.normal(key, (B, S, D), dtype=jnp.float32)

    pe = make_positional_encoding(S, D)

    out = positional_encoding_forward(x, pe)
    out = jax.block_until_ready(out)

    # Reference check (plain JAX broadcast add, same semantics as torch repeat+add)
    ref = x + pe[None, :, :]
    np.testing.assert_allclose(np.asarray(out), np.asarray(ref), rtol=1e-6, atol=1e-6)

    print("KERNEL_OK")
</pallas_src>

<mosaic_0001>
module attributes {stable_mosaic.version = 11 : i64} {
  func.func @_add_pe_kernel(%arg0: i32, %arg1: i32, %arg2: memref<2x256xf32, #tpu.memory_space<vmem>>, %arg3: memref<1x256xf32, #tpu.memory_space<vmem>>, %arg4: memref<2x256xf32, #tpu.memory_space<vmem>>) attributes {dimension_semantics = [#tpu.dimension_semantics<parallel>, #tpu.dimension_semantics<parallel>], iteration_bounds = array<i64: 1, 1>, scalar_prefetch = 0 : i64, scratch_operands = 0 : i64, tpu.core_type = #tpu.core_type<tc>, window_params = [{transform_indices = @transform_0, window_bounds = array<i64: 2, 256>}, {transform_indices = @transform_1, window_bounds = array<i64: 1, 256>}, {transform_indices = @transform_2, window_bounds = array<i64: 2, 256>}]} {
    %c0 = arith.constant 0 : index
    %c0_0 = arith.constant 0 : index
    %0 = vector.load %arg2[%c0, %c0_0] : memref<2x256xf32, #tpu.memory_space<vmem>>, vector<2x256xf32>
    %c0_1 = arith.constant 0 : index
    %c0_2 = arith.constant 0 : index
    %1 = vector.load %arg3[%c0_1, %c0_2] : memref<1x256xf32, #tpu.memory_space<vmem>>, vector<1x256xf32>
    %2 = vector.broadcast %1 : vector<1x256xf32> to vector<2x256xf32>
    %3 = arith.addf %0, %2 : vector<2x256xf32>
    %c0_3 = arith.constant 0 : index
    %c0_4 = arith.constant 0 : index
    %4 = vector.load %arg4[%c0_3, %c0_4] : memref<2x256xf32, #tpu.memory_space<vmem>>, vector<2x256xf32>
    tpu.vector_store %arg4[%c0_3, %c0_4], %3 {strides = array<i32>} : memref<2x256xf32, #tpu.memory_space<vmem>>, vector<2x256xf32>,
    return
  }
  func.func @transform_0(%arg0: i32, %arg1: i32) -> (i32, i32) {
    %c0_i32 = arith.constant 0 : i32
    return %arg1, %arg0 : i32, i32
  }
  func.func @transform_1(%arg0: i32, %arg1: i32) -> (i32, i32) {
    %c0_i32 = arith.constant 0 : i32
    %c0_i32_0 = arith.constant 0 : i32
    return %c0_i32, %arg0 : i32, i32
  }
  func.func @transform_2(%arg0: i32, %arg1: i32) -> (i32, i32) {
    %c0_i32 = arith.constant 0 : i32
    return %arg1, %arg0 : i32, i32
  }
}

</mosaic_0001>

<llo_original>
// kernel: tpu_custom_call.1
$region0: #{tpu_custom_call.1}
  #allocation0 [shape = 'u32[]', space=smem, size = 0x4, offset = 0x4, fixed_abs, tag = 'smem constant byte address 0x4 - core index']
  #allocation1 [shape = 'u32[72,128]{1,0:T(1,128)}', space=vmem, size = 0x9000, scoped, tag = 'internal scratch']
  %s0 = inlined_call_operand.hbm [shape: f32[2,256], index: 0, kind: input, shape index: {}]
  %s1 = inlined_call_operand.hbm [shape: f32[1,256], index: 1, kind: input, shape index: {}]
  %s2 = inlined_call_operand.hbm [shape: f32[2,256], index: 2, kind: output, shape index: {}]
  %s3 = sld [smem:[#allocation0]]
  $region26: #{tpu_custom_call.1} parent=0
    _
  %s5 = ssub.s32 1, %s3
  %s6 = scalar_select 0, %s5, %s3
  $region1: #{tpu_custom_call.1} parent=0
    #allocation2 [shape = 'u8[2048]{0}', space=vmem, size = 0x800, scoped, tag = 'input window, operand 0, single buffered']
    #allocation3 [shape = 's32[1]{0}', space=sflag, size = 0x4, scoped, tag = 'scoped memory for tpu_custom_call.1']
    #allocation4 [shape = 's32[1]{0}', space=sflag, size = 0x4, scoped, tag = 'scoped memory for tpu_custom_call.1']
    #allocation5 [shape = 'u8[1024]{0}', space=vmem, size = 0x400, scoped, tag = 'input window, operand 1, single buffered']
    #allocation6 [shape = 's32[1]{0}', space=sflag, size = 0x4, scoped, tag = 'scoped memory for tpu_custom_call.1']
    #allocation7 [shape = 'u8[2048]{0}', space=vmem, size = 0x800, scoped, tag = 'output window, operand 0, single buffered']
    %7 = vsyncpa [#allocation3], 0
    %8 = vsyncpa [#allocation6], 0
    %9 = vsyncpa [#allocation4], 0
    // Predicated region
    $region2: #{tpu_custom_call.1} parent=1 // pred_check
      _
    $region3: #{tpu_custom_call.1} parent=1 // pred_check_branch
      %11 = sbr.rel (0) target = $region5
    $region4: #{tpu_custom_call.1} parent=1 // pred_region
      %13 = vsyncadd [#allocation3], 0
      %s15 = sshll.u32 %s0, 4
      %s16 = int_to_ptr.hbm [resolvable:$true] %s15
      %s17 = sshll.u32 [#allocation2], 4
      %s18 = int_to_ptr.vmem [resolvable:$true] %s17
      %20 = dma.hbm_to_vmem [thread:$0]  %s16, 64, %s18, [#allocation3]
    $region5: #{tpu_custom_call.1} parent=1 // pred_fallthru
      _
    // Predicated region
    $region6: #{tpu_custom_call.1} parent=1 // pred_check
      _
    $region7: #{tpu_custom_call.1} parent=1 // pred_check_branch
      %22 = sbr.rel (0) target = $region9
    $region8: #{tpu_custom_call.1} parent=1 // pred_region
      %24 = vsyncadd [#allocation6], 0
      %s26 = sshll.u32 %s1, 4
      %s27 = int_to_ptr.hbm [resolvable:$true] %s26
      %s28 = sshll.u32 [#allocation5], 4
      %s29 = int_to_ptr.vmem [resolvable:$true] %s28
      %31 = dma.hbm_to_vmem [thread:$0]  %s27, 32, %s29, [#allocation6]
    $region9: #{tpu_custom_call.1} parent=1 // pred_fallthru
      _
    // Predicated region
    $region10: #{tpu_custom_call.1} parent=1 // pred_check
      _
    $region11: #{tpu_custom_call.1} parent=1 // pred_check_branch
      %33 = sbr.rel (0) target = $region13
    $region12: #{tpu_custom_call.1} parent=1 // pred_region
      %35 = dma.done [#allocation3], 64
    $region13: #{tpu_custom_call.1} parent=1 // pred_fallthru
      _
    // Predicated region
    $region14: #{tpu_custom_call.1} parent=1 // pred_check
      _
    $region15: #{tpu_custom_call.1} parent=1 // pred_check_branch
      %37 = sbr.rel (0) target = $region17
    $region16: #{tpu_custom_call.1} parent=1 // pred_region
      %39 = dma.done [#allocation6], 32
    $region17: #{tpu_custom_call.1} parent=1 // pred_fallthru
      _
    %v40 = vld [vmem:[#allocation2] sm:$0xf]
    %v41 = vld [vmem:[#allocation5] sm:$0x3]
    %v43 = vperm.slane %v41, 0
    %v44 = vperm.slane %v41, 1
    %v45 = vrot.slane %v44, 6
    %vm46 = vcmask 1041408
    %v47 = vsel %vm46, %v43, %v45
    %v49 = vadd.f32 %v40, %v47
    %50 = vst [vmem:[#allocation7] sm:$0xf] %v49
    // Predicated region
    $region18: #{tpu_custom_call.1} parent=1 // pred_check
      _
    $region19: #{tpu_custom_call.1} parent=1 // pred_check_branch
      %52 = sbr.rel (0) target = $region21
    $region20: #{tpu_custom_call.1} parent=1 // pred_region
      %54 = vsyncadd [#allocation4], 0
      %s56 = sshll.u32 [#allocation7], 4
      %s57 = int_to_ptr.vmem [resolvable:$true] %s56
      %s58 = sshll.u32 %s2, 4
      %s59 = int_to_ptr.hbm [resolvable:$true] %s58
      %61 = dma.vmem_to_hbm [thread:$0]  %s57, 64, %s59, [#allocation4]
    $region21: #{tpu_custom_call.1} parent=1 // pred_fallthru
      _
    // Predicated region
    $region22: #{tpu_custom_call.1} parent=1 // pred_check
      _
    $region23: #{tpu_custom_call.1} parent=1 // pred_check_branch
      %63 = sbr.rel (0) target = $region25
    $region24: #{tpu_custom_call.1} parent=1 // pred_region
      %65 = dma.done [#allocation4], 64
    $region25: #{tpu_custom_call.1} parent=1 // pred_fallthru
      _
    %66 = vsyncpa [#allocation3], 1
    %67 = vsyncpa [#allocation6], 1
    %68 = vsyncpa [#allocation4], 1

</llo_original>
